<compile_context>
chip_gen: v7x
topology: tpu7x:2x2x1
jax: 0.10.0
libtpu: 0.0.40
codegen_flags: <defaults>
</compile_context>

<pallas_src>
import functools

import jax
import jax.numpy as jnp
from jax.experimental import pallas as pl
from jax.experimental.pallas import tpu as pltpu

BN_EPS = 1e-5
LANE = 128
SUBLANE = 8
VMEM_LIMIT_BYTES = 48 * 1024 * 1024   # headroom under v7x's 64 MiB physical VMEM


def _round_up(x: int, m: int) -> int:
    return ((x + m - 1) // m) * m


def _choose_tile_m(m_rows: int) -> int:
    # Biggest M-tile that still gives the pipeline ~4+ grid steps to overlap
    # DMA with MXU compute; 2 inputs x 2 buffers x tile stays far below VMEM
    # limits on all of v5e / v6e / v7x for these channel counts.
    for tm in (512, 256, 128, 64, 32, 16, 8):
        if m_rows >= 4 * tm:
            return tm
    return SUBLANE


# ---------------------------------------------------------------------------
# pass 1: tiled 1x1-conv matmul + per-channel sum / sum-of-squares reduction
# ---------------------------------------------------------------------------
def _conv_stats_kernel(x_ref, w_ref, sum_ref, sq_ref):
    @pl.when(pl.program_id(0) == 0)
    def _():
        sum_ref[...] = jnp.zeros_like(sum_ref)
        sq_ref[...] = jnp.zeros_like(sq_ref)

    y = jnp.dot(x_ref[...], w_ref[...], preferred_element_type=jnp.float32)
    tm, cp = y.shape
    yg = y.reshape(tm // SUBLANE, SUBLANE, cp)
    # keep (8, Cp) sublane-shaped partial accumulators (pure VPU adds); the
    # single cross-sublane reduce happens once per tile in pass 2.
    sum_ref[...] += jnp.sum(yg, axis=0)
    sq_ref[...] += jnp.sum(yg * yg, axis=0)


# ---------------------------------------------------------------------------
# pass 2: recompute the cheap matmul per tile and apply global-batch BN
# ---------------------------------------------------------------------------
def _make_bn_norm_kernel(inv_m: float):
    def kernel(x_ref, w_ref, sum_ref, sq_ref, g_ref, b_ref, o_ref):
        y = jnp.dot(x_ref[...], w_ref[...], preferred_element_type=jnp.float32)
        csum = jnp.sum(sum_ref[...], axis=0, keepdims=True)      # (1, Cp)
        csq = jnp.sum(sq_ref[...], axis=0, keepdims=True)        # (1, Cp)
        mean = csum * inv_m
        var = csq * inv_m - mean * mean                           # one-pass stats
        scale = g_ref[...] * jax.lax.rsqrt(var + BN_EPS)
        shift = b_ref[...] - mean * scale
        o_ref[...] = y * scale + shift
    return kernel


def shortcut_projection(x_nchw, conv_w, conv_b, bn_gamma, bn_beta, *, stride):
    """bn(conv1x1_stride(x)) with training-mode (batch) BatchNorm statistics.

    x_nchw : [N, Cin, H, W] f32
    conv_w : [Cout, Cin]    (PyTorch [Cout, Cin, 1, 1] weight, squeezed)
    conv_b : [Cout]         accepted but not added -- exactly cancelled by the
                            batch-mean subtraction of the following BN.
    """
    del conv_b  # cancelled by training-mode BN mean subtraction
    N, Cin, H, W = x_nchw.shape
    Cout = conv_w.shape[0]

    # 1x1 conv with stride == strided subsample + matmul (no im2col).
    xs = jnp.transpose(x_nchw[:, :, ::stride, ::stride], (0, 2, 3, 1))   # NHWC
    Ho, Wo = xs.shape[1], xs.shape[2]
    M = N * Ho * Wo

    tm = _choose_tile_m(M)
    Mp = _round_up(M, tm)
    Cp = _round_up(Cout, LANE)            # lane-dense output -> unmasked stores

    x2 = jnp.pad(xs.reshape(M, Cin), ((0, Mp - M), (0, 0))).astype(jnp.bfloat16)
    wp = jnp.pad(conv_w.T, ((0, 0), (0, Cp - Cout))).astype(jnp.bfloat16)
    gp = jnp.pad(bn_gamma, (0, Cp - Cout)).reshape(1, Cp).astype(jnp.float32)
    bp = jnp.pad(bn_beta, (0, Cp - Cout)).reshape(1, Cp).astype(jnp.float32)

    grid = (Mp // tm,)
    x_spec = pl.BlockSpec((tm, Cin), lambda i: (i, 0))
    w_spec = pl.BlockSpec((Cin, Cp), lambda i: (0, 0))
    vec_spec = pl.BlockSpec((1, Cp), lambda i: (0, 0))
    acc_spec = pl.BlockSpec((SUBLANE, Cp), lambda i: (0, 0))

    # ---- pass 1: global per-channel sum / sum-of-squares (reduction axis) ----
    col_sum, col_sq = pl.pallas_call(
        _conv_stats_kernel,
        grid=grid,
        in_specs=[x_spec, w_spec],
        out_specs=[acc_spec, acc_spec],
        out_shape=[jax.ShapeDtypeStruct((SUBLANE, Cp), jnp.float32),
                   jax.ShapeDtypeStruct((SUBLANE, Cp), jnp.float32)],
        compiler_params=pltpu.CompilerParams(
            dimension_semantics=("arbitrary",),
            vmem_limit_bytes=VMEM_LIMIT_BYTES),
    )(x2, wp)

    # ---- pass 2: normalize (independent tiles -> megacore parallel on v7x) ----
    out = pl.pallas_call(
        _make_bn_norm_kernel(1.0 / float(M)),
        grid=grid,
        in_specs=[x_spec, w_spec, acc_spec, acc_spec, vec_spec, vec_spec],
        out_specs=pl.BlockSpec((tm, Cp), lambda i: (i, 0)),
        out_shape=jax.ShapeDtypeStruct((Mp, Cp), jnp.float32),
        compiler_params=pltpu.CompilerParams(
            dimension_semantics=("parallel",),
            vmem_limit_bytes=VMEM_LIMIT_BYTES),
    )(x2, wp, col_sum, col_sq, gp, bp)

    out = out[:M, :Cout].reshape(N, Ho, Wo, Cout)
    return jnp.transpose(out, (0, 3, 1, 2))                       # back to NCHW


# ---------------------------------------------------------------------------
# pure-JAX reference (PyTorch semantics: conv bias + training-mode BN)
# ---------------------------------------------------------------------------
def _reference(x_nchw, conv_w, conv_b, bn_gamma, bn_beta, stride):
    xs = x_nchw[:, :, ::stride, ::stride]
    y = jnp.einsum('nchw,oc->nohw', xs, conv_w) + conv_b[None, :, None, None]
    mean = jnp.mean(y, axis=(0, 2, 3), keepdims=True)
    var = jnp.mean(jnp.square(y - mean), axis=(0, 2, 3), keepdims=True)
    y = (y - mean) * jax.lax.rsqrt(var + BN_EPS)
    return y * bn_gamma[None, :, None, None] + bn_beta[None, :, None, None]


if __name__ == "__main__":
    key = jax.random.PRNGKey(0)
    kx, kw, kb, kg, kbe = jax.random.split(key, 5)

    N, C_IN, H, W = 2, 32, 32, 32
    C_OUT, STRIDE = 128, 2

    x = jax.random.normal(kx, (N, C_IN, H, W), jnp.float32)
    conv_w = jax.random.normal(kw, (C_OUT, C_IN), jnp.float32) / jnp.sqrt(float(C_IN))
    conv_b = 0.1 * jax.random.normal(kb, (C_OUT,), jnp.float32)
    gamma = 1.0 + 0.1 * jax.random.normal(kg, (C_OUT,), jnp.float32)
    beta = 0.1 * jax.random.normal(kbe, (C_OUT,), jnp.float32)

    fwd = jax.jit(functools.partial(shortcut_projection, stride=STRIDE))
    out = fwd(x, conv_w, conv_b, gamma, beta)
    jax.block_until_ready(out)

    ref = _reference(x, conv_w, conv_b, gamma, beta, STRIDE)
    assert out.shape == (N, C_OUT, H // STRIDE, W // STRIDE), out.shape
    assert bool(jnp.allclose(out, ref, atol=3e-2, rtol=3e-2)), \
        float(jnp.max(jnp.abs(out - ref)))
    print("KERNEL_OK")
</pallas_src>

<mosaic_0001>
module attributes {stable_mosaic.version = 11 : i64} {
  func.func @_conv_stats_kernel(%arg0: i32, %arg1: memref<128x32xbf16, #tpu.memory_space<vmem>>, %arg2: memref<32x128xbf16, #tpu.memory_space<vmem>>, %arg3: memref<8x128xf32, #tpu.memory_space<vmem>>, %arg4: memref<8x128xf32, #tpu.memory_space<vmem>>) attributes {dimension_semantics = [#tpu.dimension_semantics<arbitrary>], iteration_bounds = array<i64: 4>, scalar_prefetch = 0 : i64, scratch_operands = 0 : i64, tpu.core_type = #tpu.core_type<tc>, window_params = [{transform_indices = @transform_0, window_bounds = array<i64: 128, 32>}, {pipeline_mode = #tpu.pipeline_mode<synchronous>, transform_indices = @transform_1, window_bounds = array<i64: 32, 128>}, {pipeline_mode = #tpu.pipeline_mode<synchronous>, transform_indices = @transform_2, window_bounds = array<i64: 8, 128>}, {pipeline_mode = #tpu.pipeline_mode<synchronous>, transform_indices = @transform_3, window_bounds = array<i64: 8, 128>}]} {
    %c0_i32 = arith.constant 0 : i32
    %0 = arith.cmpi eq, %arg0, %c0_i32 : i32
    %1 = arith.extui %0 : i1 to i32
    %c0_i32_0 = arith.constant 0 : i32
    %2 = arith.cmpi ne, %1, %c0_i32_0 : i32
    scf.if %2 {
      %cst_14 = arith.constant 0.000000e+00 : f32
      %16 = vector.broadcast %cst_14 : f32 to vector<8x128xf32>
      %c0_15 = arith.constant 0 : index
      %c0_16 = arith.constant 0 : index
      %17 = vector.load %arg3[%c0_15, %c0_16] : memref<8x128xf32, #tpu.memory_space<vmem>>, vector<8x128xf32>
      tpu.vector_store %arg3[%c0_15, %c0_16], %16 {strides = array<i32>} : memref<8x128xf32, #tpu.memory_space<vmem>>, vector<8x128xf32>,
      %cst_17 = arith.constant 0.000000e+00 : f32
      %18 = vector.broadcast %cst_17 : f32 to vector<8x128xf32>
      %c0_18 = arith.constant 0 : index
      %c0_19 = arith.constant 0 : index
      %19 = vector.load %arg4[%c0_18, %c0_19] : memref<8x128xf32, #tpu.memory_space<vmem>>, vector<8x128xf32>
      tpu.vector_store %arg4[%c0_18, %c0_19], %18 {strides = array<i32>} : memref<8x128xf32, #tpu.memory_space<vmem>>, vector<8x128xf32>,
    } else {
    }
    %c0 = arith.constant 0 : index
    %c0_1 = arith.constant 0 : index
    %3 = vector.load %arg1[%c0, %c0_1] : memref<128x32xbf16, #tpu.memory_space<vmem>>, vector<128x32xbf16>
    %c0_2 = arith.constant 0 : index
    %c0_3 = arith.constant 0 : index
    %4 = vector.load %arg2[%c0_2, %c0_3] : memref<32x128xbf16, #tpu.memory_space<vmem>>, vector<32x128xbf16>
    %cst = arith.constant dense<0.000000e+00> : vector<128x128xf32>
    %5 = tpu.matmul %3, %4, %cst {dimension_numbers = #tpu.dot_dimension_numbers<[1], [0], [0], [1], [0, 0, 1, 1], [], []>} : vector<128x32xbf16>, vector<32x128xbf16>, vector<128x128xf32> -> vector<128x128xf32>
    %6 = vector.shape_cast %5 : vector<128x128xf32> to vector<16x8x128xf32>
    %c0_4 = arith.constant 0 : index
    %c0_5 = arith.constant 0 : index
    %7 = vector.load %arg3[%c0_4, %c0_5] : memref<8x128xf32, #tpu.memory_space<vmem>>, vector<8x128xf32>
    %cst_6 = arith.constant dense<0.000000e+00> : vector<8x128xf32>
    %8 = vector.multi_reduction <add>, %6, %cst_6 [0] : vector<16x8x128xf32> to vector<8x128xf32>
    %9 = arith.addf %7, %8 : vector<8x128xf32>
    %c0_7 = arith.constant 0 : index
    %c0_8 = arith.constant 0 : index
    %10 = vector.load %arg3[%c0_7, %c0_8] : memref<8x128xf32, #tpu.memory_space<vmem>>, vector<8x128xf32>
    tpu.vector_store %arg3[%c0_7, %c0_8], %9 {strides = array<i32>} : memref<8x128xf32, #tpu.memory_space<vmem>>, vector<8x128xf32>,
    %c0_9 = arith.constant 0 : index
    %c0_10 = arith.constant 0 : index
    %11 = vector.load %arg4[%c0_9, %c0_10] : memref<8x128xf32, #tpu.memory_space<vmem>>, vector<8x128xf32>
    %12 = arith.mulf %6, %6 : vector<16x8x128xf32>
    %cst_11 = arith.constant dense<0.000000e+00> : vector<8x128xf32>
    %13 = vector.multi_reduction <add>, %12, %cst_11 [0] : vector<16x8x128xf32> to vector<8x128xf32>
    %14 = arith.addf %11, %13 : vector<8x128xf32>
    %c0_12 = arith.constant 0 : index
    %c0_13 = arith.constant 0 : index
    %15 = vector.load %arg4[%c0_12, %c0_13] : memref<8x128xf32, #tpu.memory_space<vmem>>, vector<8x128xf32>
    tpu.vector_store %arg4[%c0_12, %c0_13], %14 {strides = array<i32>} : memref<8x128xf32, #tpu.memory_space<vmem>>, vector<8x128xf32>,
    return
  }
  func.func @transform_0(%arg0: i32) -> (i32, i32) {
    %c0_i32 = arith.constant 0 : i32
    %c0_i32_0 = arith.constant 0 : i32
    return %arg0, %c0_i32 : i32, i32
  }
  func.func @transform_1(%arg0: i32) -> (i32, i32) {
    %c0_i32 = arith.constant 0 : i32
    %c0_i32_0 = arith.constant 0 : i32
    %c0_i32_1 = arith.constant 0 : i32
    return %c0_i32, %c0_i32_0 : i32, i32
  }
  func.func @transform_2(%arg0: i32) -> (i32, i32) {
    %c0_i32 = arith.constant 0 : i32
    %c0_i32_0 = arith.constant 0 : i32
    %c0_i32_1 = arith.constant 0 : i32
    return %c0_i32, %c0_i32_0 : i32, i32
  }
  func.func @transform_3(%arg0: i32) -> (i32, i32) {
    %c0_i32 = arith.constant 0 : i32
    %c0_i32_0 = arith.constant 0 : i32
    %c0_i32_1 = arith.constant 0 : i32
    return %c0_i32, %c0_i32_0 : i32, i32
  }
}

module attributes {stable_mosaic.version = 11 : i64} {
  func.func @kernel(%arg0: i32, %arg1: memref<128x32xbf16, #tpu.memory_space<vmem>>, %arg2: memref<32x128xbf16, #tpu.memory_space<vmem>>, %arg3: memref<8x128xf32, #tpu.memory_space<vmem>>, %arg4: memref<8x128xf32, #tpu.memory_space<vmem>>, %arg5: memref<1x128xf32, #tpu.memory_space<vmem>>, %arg6: memref<1x128xf32, #tpu.memory_space<vmem>>, %arg7: memref<128x128xf32, #tpu.memory_space<vmem>>) attributes {dimension_semantics = [#tpu.dimension_semantics<parallel>], iteration_bounds = array<i64: 4>, scalar_prefetch = 0 : i64, scratch_operands = 0 : i64, tpu.core_type = #tpu.core_type<tc>, window_params = [{transform_indices = @transform_0, window_bounds = array<i64: 128, 32>}, {pipeline_mode = #tpu.pipeline_mode<synchronous>, transform_indices = @transform_1, window_bounds = array<i64: 32, 128>}, {pipeline_mode = #tpu.pipeline_mode<synchronous>, transform_indices = @transform_2, window_bounds = array<i64: 8, 128>}, {pipeline_mode = #tpu.pipeline_mode<synchronous>, transform_indices = @transform_3, window_bounds = array<i64: 8, 128>}, {pipeline_mode = #tpu.pipeline_mode<synchronous>, transform_indices = @transform_4, window_bounds = array<i64: 1, 128>}, {pipeline_mode = #tpu.pipeline_mode<synchronous>, transform_indices = @transform_5, window_bounds = array<i64: 1, 128>}, {transform_indices = @transform_6, window_bounds = array<i64: 128, 128>}]} {
    %c0 = arith.constant 0 : index
    %c0_0 = arith.constant 0 : index
    %0 = vector.load %arg1[%c0, %c0_0] : memref<128x32xbf16, #tpu.memory_space<vmem>>, vector<128x32xbf16>
    %c0_1 = arith.constant 0 : index
    %c0_2 = arith.constant 0 : index
    %1 = vector.load %arg2[%c0_1, %c0_2] : memref<32x128xbf16, #tpu.memory_space<vmem>>, vector<32x128xbf16>
    %cst = arith.constant dense<0.000000e+00> : vector<128x128xf32>
    %2 = tpu.matmul %0, %1, %cst {dimension_numbers = #tpu.dot_dimension_numbers<[1], [0], [0], [1], [0, 0, 1, 1], [], []>} : vector<128x32xbf16>, vector<32x128xbf16>, vector<128x128xf32> -> vector<128x128xf32>
    %c0_3 = arith.constant 0 : index
    %c0_4 = arith.constant 0 : index
    %3 = vector.load %arg3[%c0_3, %c0_4] : memref<8x128xf32, #tpu.memory_space<vmem>>, vector<8x128xf32>
    %cst_5 = arith.constant dense<0.000000e+00> : vector<128xf32>
    %4 = vector.multi_reduction <add>, %3, %cst_5 [0] : vector<8x128xf32> to vector<128xf32>
    %5 = vector.shape_cast %4 : vector<128xf32> to vector<1x128xf32>
    %c0_6 = arith.constant 0 : index
    %c0_7 = arith.constant 0 : index
    %6 = vector.load %arg4[%c0_6, %c0_7] : memref<8x128xf32, #tpu.memory_space<vmem>>, vector<8x128xf32>
    %cst_8 = arith.constant dense<0.000000e+00> : vector<128xf32>
    %7 = vector.multi_reduction <add>, %6, %cst_8 [0] : vector<8x128xf32> to vector<128xf32>
    %8 = vector.shape_cast %7 : vector<128xf32> to vector<1x128xf32>
    %cst_9 = arith.constant 0.001953125 : f32
    %9 = vector.broadcast %cst_9 : f32 to vector<1x128xf32>
    %10 = arith.mulf %5, %9 : vector<1x128xf32>
    %cst_10 = arith.constant 0.001953125 : f32
    %11 = vector.broadcast %cst_10 : f32 to vector<1x128xf32>
    %12 = arith.mulf %8, %11 : vector<1x128xf32>
    %13 = arith.mulf %10, %10 : vector<1x128xf32>
    %14 = arith.subf %12, %13 : vector<1x128xf32>
    %c0_11 = arith.constant 0 : index
    %c0_12 = arith.constant 0 : index
    %15 = vector.load %arg5[%c0_11, %c0_12] : memref<1x128xf32, #tpu.memory_space<vmem>>, vector<1x128xf32>
    %cst_13 = arith.constant 9.99999974E-6 : f32
    %16 = vector.broadcast %cst_13 : f32 to vector<1x128xf32>
    %17 = arith.addf %14, %16 : vector<1x128xf32>
    %18 = math.rsqrt %17 : vector<1x128xf32>
    %19 = arith.mulf %15, %18 : vector<1x128xf32>
    %c0_14 = arith.constant 0 : index
    %c0_15 = arith.constant 0 : index
    %20 = vector.load %arg6[%c0_14, %c0_15] : memref<1x128xf32, #tpu.memory_space<vmem>>, vector<1x128xf32>
    %21 = arith.mulf %10, %19 : vector<1x128xf32>
    %22 = arith.subf %20, %21 : vector<1x128xf32>
    %23 = vector.broadcast %19 : vector<1x128xf32> to vector<128x128xf32>
    %24 = arith.mulf %2, %23 : vector<128x128xf32>
    %25 = vector.broadcast %22 : vector<1x128xf32> to vector<128x128xf32>
    %26 = arith.addf %24, %25 : vector<128x128xf32>
    %c0_16 = arith.constant 0 : index
    %c0_17 = arith.constant 0 : index
    %27 = vector.load %arg7[%c0_16, %c0_17] : memref<128x128xf32, #tpu.memory_space<vmem>>, vector<128x128xf32>
    tpu.vector_store %arg7[%c0_16, %c0_17], %26 {strides = array<i32>} : memref<128x128xf32, #tpu.memory_space<vmem>>, vector<128x128xf32>,
    return
  }
  func.func @transform_0(%arg0: i32) -> (i32, i32) {
    %c0_i32 = arith.constant 0 : i32
    %c0_i32_0 = arith.constant 0 : i32
    return %arg0, %c0_i32 : i32, i32
  }
  func.func @transform_1(%arg0: i32) -> (i32, i32) {
    %c0_i32 = arith.constant 0 : i32
    %c0_i32_0 = arith.constant 0 : i32
    %c0_i32_1 = arith.constant 0 : i32
    return %c0_i32, %c0_i32_0 : i32, i32
  }
  func.func @transform_2(%arg0: i32) -> (i32, i32) {
    %c0_i32 = arith.constant 0 : i32
    %c0_i32_0 = arith.constant 0 : i32
    %c0_i32_1 = arith.constant 0 : i32
    return %c0_i32, %c0_i32_0 : i32, i32
  }
  func.func @transform_3(%arg0: i32) -> (i32, i32) {
    %c0_i32 = arith.constant 0 : i32
    %c0_i32_0 = arith.constant 0 : i32
    %c0_i32_1 = arith.constant 0 : i32
    return %c0_i32, %c0_i32_0 : i32, i32
  }
  func.func @transform_4(%arg0: i32) -> (i32, i32) {
    %c0_i32 = arith.constant 0 : i32
    %c0_i32_0 = arith.constant 0 : i32
    %c0_i32_1 = arith.constant 0 : i32
    return %c0_i32, %c0_i32_0 : i32, i32
  }
  func.func @transform_5(%arg0: i32) -> (i32, i32) {
    %c0_i32 = arith.constant 0 : i32
    %c0_i32_0 = arith.constant 0 : i32
    %c0_i32_1 = arith.constant 0 : i32
    return %c0_i32, %c0_i32_0 : i32, i32
  }
  func.func @transform_6(%arg0: i32) -> (i32, i32) {
    %c0_i32 = arith.constant 0 : i32
    %c0_i32_0 = arith.constant 0 : i32
    return %arg0, %c0_i32 : i32, i32
  }
}

</mosaic_0001>

<llo_original>
// kernel: shortcut_projection.2
$region0: #{shortcut_projection.2}
  #allocation0 [shape = 'u32[]', space=smem, size = 0x4, offset = 0x4, fixed_abs, tag = 'smem constant byte address 0x4 - core index']
  #allocation1 [shape = 'u32[144,128]{1,0:T(1,128)}', space=vmem, size = 0x12000, scoped, tag = 'internal scratch']
  %s0 = inlined_call_operand.vmem [shape: bf16[512,32], index: 0, kind: input, shape index: {}]
  %s1 = inlined_call_operand.vmem [shape: bf16[32,128], index: 1, kind: input, shape index: {}]
  %s2 = inlined_call_operand.vmem [shape: f32[8,128], index: 2, kind: output, shape index: {0}]
  %s3 = inlined_call_operand.vmem [shape: f32[8,128], index: 3, kind: output, shape index: {1}]
  %4 = xla_tuple %s2, %s3
  %s5 = sld [smem:[#allocation0]]
  $region53: #{shortcut_projection.2} parent=0
    _
  %s7 = ssub.s32 1, %s5
  %s8 = scalar_select 0, %s7, %s5
  loop: start=0, step=1, limit=6
  $region2: #{shortcut_projection.2} parent=0 // loop_pre_header
    _
  $region3: #{shortcut_projection.2} parent=0 // loop_header
    %s10 = sphi 0, %s14
    %p11 = scmp.ge.s32.totalorder %s10, 6
    %s20 = sphi 0, %s22
    %s23 = sphi 0, %s20
    %s24 = sphi 0, %s23
    %s40 = sphi 0, %s24
    %s44 = sphi 0, %s44
    %s46 = sphi 0, %s44
    %s47 = sphi 0, %s46
    %s61 = sphi 0, %s47
    %s65 = sphi 0, %s65
    %s67 = sphi 0, %s65
    %s68 = sphi 0, %s67
    %s82 = sphi 0, %s68
    %s86 = sphi 0, %s86
    %s88 = sphi 0, %s86
    %s89 = sphi 0, %s88
    %s103 = sphi 0, %s89
  $region4: #{shortcut_projection.2} parent=0 // loop_header_branch
    %13 = sbr.rel (%p11) target = $region8
  $region5: #{shortcut_projection.2} parent=0 // loop_body
    %s15 = ssub.s32 %s10, 1
    %s16 = ssub.s32 %s10, 2
    %s17 = sadd.s32 %s10, 1
    %s18 = ssub.s32 %s10, %s17
    %p19 = scmp.eq.s32.totalorder %s18, 0
    %s21 = sadd.s32 %s20, 1
    %s22 = scalar_select %p19, %s20, %s21
    %p25 = pneg %p19
    %p26 = scmp.eq.s32.totalorder %s10, 3
    %p27 = por %p25, %p26
    %p28 = scmp.ne.s32.totalorder %s20, %s23
    %p29 = scmp.eq.s32.totalorder %s10, 0
    %p30 = por %p28, %p29
    %p31 = scmp.ne.s32.totalorder %s20, %s23
    %p32 = scmp.eq.s32.totalorder %s15, 3
    %p33 = por %p31, %p32
    %p34 = scmp.ne.s32.totalorder %s23, %s24
    %p35 = scmp.eq.s32.totalorder %s15, 0
    %p36 = por %p34, %p35
    %p37 = scmp.ne.s32.totalorder %s23, %s24
    %p38 = scmp.eq.s32.totalorder %s16, 3
    %p39 = por %p37, %p38
    %p41 = scmp.ne.s32.totalorder %s24, %s40
    %p42 = scmp.eq.s32.totalorder %s16, 0
    %p43 = por %p41, %p42
    %s45 = sadd.s32 %s44, 1
    %p48 = scmp.eq.s32.totalorder %s10, 3
    %p49 = scmp.ne.s32.totalorder %s44, %s46
    %p50 = scmp.eq.s32.totalorder %s10, 0
    %p51 = por %p49, %p50
    %p52 = scmp.ne.s32.totalorder %s44, %s46
    %p53 = scmp.eq.s32.totalorder %s15, 3
    %p54 = por %p52, %p53
    %p55 = scmp.ne.s32.totalorder %s46, %s47
    %p56 = scmp.eq.s32.totalorder %s15, 0
    %p57 = por %p55, %p56
    %p58 = scmp.ne.s32.totalorder %s46, %s47
    %p59 = scmp.eq.s32.totalorder %s16, 3
    %p60 = por %p58, %p59
    %p62 = scmp.ne.s32.totalorder %s47, %s61
    %p63 = scmp.eq.s32.totalorder %s16, 0
    %p64 = por %p62, %p63
    %s66 = sadd.s32 %s65, 1
    %p69 = scmp.eq.s32.totalorder %s10, 3
    %p70 = scmp.ne.s32.totalorder %s65, %s67
    %p71 = scmp.eq.s32.totalorder %s10, 0
    %p72 = por %p70, %p71
    %p73 = scmp.ne.s32.totalorder %s65, %s67
    %p74 = scmp.eq.s32.totalorder %s15, 3
    %p75 = por %p73, %p74
    %p76 = scmp.ne.s32.totalorder %s67, %s68
    %p77 = scmp.eq.s32.totalorder %s15, 0
    %p78 = por %p76, %p77
    %p79 = scmp.ne.s32.totalorder %s67, %s68
    %p80 = scmp.eq.s32.totalorder %s16, 3
    %p81 = por %p79, %p80
    %p83 = scmp.ne.s32.totalorder %s68, %s82
    %p84 = scmp.eq.s32.totalorder %s16, 0
    %p85 = por %p83, %p84
    %s87 = sadd.s32 %s86, 1
    %p90 = scmp.eq.s32.totalorder %s10, 3
    %p91 = scmp.ne.s32.totalorder %s86, %s88
    %p92 = scmp.eq.s32.totalorder %s10, 0
    %p93 = por %p91, %p92
    %p94 = scmp.ne.s32.totalorder %s86, %s88
    %p95 = scmp.eq.s32.totalorder %s15, 3
    %p96 = por %p94, %p95
    %p97 = scmp.ne.s32.totalorder %s88, %s89
    %p98 = scmp.eq.s32.totalorder %s15, 0
    %p99 = por %p97, %p98
    %p100 = scmp.ne.s32.totalorder %s88, %s89
    %p101 = scmp.eq.s32.totalorder %s16, 3
    %p102 = por %p100, %p101
    %p104 = scmp.ne.s32.totalorder %s89, %s103
    %p105 = scmp.eq.s32.totalorder %s16, 0
    %p106 = por %p104, %p105
    %p107 = scmp.le.s32.totalorder 1, %s10
    %p108 = scmp.lt.s32.totalorder %s10, 5
    %p109 = pnand %p107, %p108
    %p110 = pneg %p109
    // Predicated region
    $region9: #{shortcut_projection.2} parent=5 // pred_check
      _
    $region10: #{shortcut_projection.2} parent=5 // pred_check_branch
      %112 = sbr.rel (%p109) target = $region12
    $region11: #{shortcut_projection.2} parent=5 // pred_region
      %s113 = ssub.s32 %s10, 1
      // Predicated region
      $region13: #{shortcut_projection.2} parent=11 // pred_check
        %p114 = pneg %p57
      $region14: #{shortcut_projection.2} parent=11 // pred_check_branch
        %116 = sbr.rel (%p114) target = $region16
      $region15: #{shortcut_projection.2} parent=11 // pred_region
        _
      $region16: #{shortcut_projection.2} parent=11 // pred_fallthru
        _
    $region12: #{shortcut_projection.2} parent=5 // pred_fallthru
      _
    %p117 = scmp.lt.s32.totalorder %s10, 4
    // Predicated region
    $region17: #{shortcut_projection.2} parent=5 // pred_check
      %p118 = pneg %p117
    $region18: #{shortcut_projection.2} parent=5 // pred_check_branch
      %120 = sbr.rel (%p118) target = $region20
    $region19: #{shortcut_projection.2} parent=5 // pred_region
      // Predicated region
      $region21: #{shortcut_projection.2} parent=19 // pred_check
        %p121 = pneg %p30
      $region22: #{shortcut_projection.2} parent=19 // pred_check_branch
        %123 = sbr.rel (%p121) target = $region24
      $region23: #{shortcut_projection.2} parent=19 // pred_region
        %s124 = smul.u32 16, %s10
        %p125 = scmp.lt.s32.totalorder %s124, 63
        %s126 = scalar_select %p125, %s124, 63
        %s127 = smul.addr %s126, 4
        %s128 = scalar_lea.vmem %s0, %s127
        %s129 = smul.u32 16, %s10
      $region24: #{shortcut_projection.2} parent=19 // pred_fallthru
        _
    $region20: #{shortcut_projection.2} parent=5 // pred_fallthru
      _
    %p130 = scmp.le.s32.totalorder 1, %s10
    %p131 = scmp.lt.s32.totalorder %s10, 5
    %p132 = pnand %p130, %p131
    %p133 = pneg %p132
    // Predicated region
    $region25: #{shortcut_projection.2} parent=5 // pred_check
      _
    $region26: #{shortcut_projection.2} parent=5 // pred_check_branch
      %135 = sbr.rel (%p132) target = $region28
    $region27: #{shortcut_projection.2} parent=5 // pred_region
      %s136 = ssub.s32 %s10, 1
      %s137 = smul.u32 16, %s15
      %p138 = scmp.lt.s32.totalorder %s137, 63
      %s139 = scalar_select %p138, %s137, 63
      %s140 = smul.addr %s139, 4
      %s141 = scalar_lea.vmem %s0, %s140
      %p142 = pneg %p36
      %p143 = pneg %p33
      %p144 = pneg %p57
      %p145 = pneg %p54
      %p146 = pneg %p78
      %p147 = pneg %p75
      %p148 = pneg %p99
      %p149 = pneg %p96
      %s150 = smul.u32 16, %s15
      %p151 = scmp.lt.s32.totalorder %s150, 63
      %s152 = scalar_select %p151, %s150, 63
      %s153 = smul.addr %s152, 4
      %s154 = scalar_lea.vmem %s0, %s153
      %s155 = smul.u32 16, %s15
      %p157 = scmp.eq.s32.totalorder %s15, 0
      // Predicated region
      $region29: #{shortcut_projection.2} parent=27 // pred_check
        %p158 = pneg %p157
      $region30: #{shortcut_projection.2} parent=27 // pred_check_branch
        %160 = sbr.rel (%p158) target = $region32
      $region31: #{shortcut_projection.2} parent=27 // pred_region
        %161 = vst [vmem:[%s2] sm:$0xff] 0.0
        %162 = vst [vmem:[%s3] sm:$0xff] 0.0
      $region32: #{shortcut_projection.2} parent=27 // pred_fallthru
        _
      %v163 = vld [vmem:[%s154] sm:$0xf]
      %v164 = vld [vmem:[%s154 + $0x4] sm:$0xf]
      %v165 = vld [vmem:[%s154 + $0x8] sm:$0xf]
      %v166 = vld [vmem:[%s154 + $0xc] sm:$0xf]
      %v167 = vld [vmem:[%s154 + $0x10] sm:$0xf]
      %v168 = vld [vmem:[%s154 + $0x14] sm:$0xf]
      %v169 = vld [vmem:[%s154 + $0x18] sm:$0xf]
      %v170 = vld [vmem:[%s154 + $0x1c] sm:$0xf]
      %v171 = vld [vmem:[%s154 + $0x20] sm:$0xf]
      %v172 = vld [vmem:[%s154 + $0x24] sm:$0xf]
      %v173 = vld [vmem:[%s154 + $0x28] sm:$0xf]
      %v174 = vld [vmem:[%s154 + $0x2c] sm:$0xf]
      %v175 = vld [vmem:[%s154 + $0x30] sm:$0xf]
      %v176 = vld [vmem:[%s154 + $0x34] sm:$0xf]
      %v177 = vld [vmem:[%s154 + $0x38] sm:$0xf]
      %v178 = vld [vmem:[%s154 + $0x3c] sm:$0xf]
      %v179 = vld [vmem:[%s1] sm:$0xf]
      %v180 = vld [vmem:[%s1 + $0x4] sm:$0xf]
      %v181 = vld [vmem:[%s1 + $0x8] sm:$0xf]
      %v182 = vld [vmem:[%s1 + $0xc] sm:$0xf]
      %v199 = vunpack.c.l.b16 %v163
      %v200 = vunpack.c.l.b16 %v164
      %v201 = vunpack.c.l.b16 %v165
      %v202 = vunpack.c.l.b16 %v166
      %v203 = vunpack.c.l.b16 %v167
      %v204 = vunpack.c.l.b16 %v168
      %v205 = vunpack.c.l.b16 %v169
      %v206 = vunpack.c.l.b16 %v170
      %v207 = vunpack.c.l.b16 %v171
      %v208 = vunpack.c.l.b16 %v172
      %v209 = vunpack.c.l.b16 %v173
      %v210 = vunpack.c.l.b16 %v174
      %v211 = vunpack.c.l.b16 %v175
      %v212 = vunpack.c.l.b16 %v176
      %v213 = vunpack.c.l.b16 %v177
      %v214 = vunpack.c.l.b16 %v178
      %v215 = vpack.c.b16 %v200, %v199
      %v216 = vpack.c.b16 %v202, %v201
      %v217 = vpack.c.b16 %v204, %v203
      %v218 = vpack.c.b16 %v206, %v205
      %v219 = vpack.c.b16 %v208, %v207
      %v220 = vpack.c.b16 %v210, %v209
      %v221 = vpack.c.b16 %v212, %v211
      %v222 = vpack.c.b16 %v214, %v213
      %v227 = vunpack.c.l.b16 %v179
      %v228 = vunpack.c.l.b16 %v180
      %v229 = vunpack.c.l.b16 %v181
      %v230 = vunpack.c.l.b16 %v182
      %v231 = vpack.c.b16 %v228, %v227
      %v232 = vpack.c.b16 %v230, %v229
      %vm235 = vcmask 261120
      %v237 = vsel %vm235, %v215, 0
      %v240 = vsel %vm235, %v216, 0
      %v243 = vsel %vm235, %v217, 0
      %v246 = vsel %vm235, %v218, 0
      %v249 = vsel %vm235, %v219, 0
      %v252 = vsel %vm235, %v220, 0
      %v255 = vsel %vm235, %v221, 0
      %v258 = vsel %vm235, %v222, 0
      %260 = vmatprep.subr.bf16.mxu0 0
      %261 = vmatpush1.bf16.msra.mxu0 %v231
      %262 = vmatprep.subr.bf16.mxu0 0
      %263 = vmatpush1.bf16.msra.mxu0 %v232
      %264 = vmatprep.subr.bf16.mxu0 0
      %265 = vmatpush1.bf16.msra.mxu0 0
      %266 = vmatprep.subr.bf16.mxu0 0
      %267 = vmatpush1.bf16.msra.mxu0 0
      %268 = vmatprep.subr.bf16.mxu0 0
      %269 = vmatpush1.bf16.msra.mxu0 0
      %270 = vmatprep.subr.bf16.mxu0 0
      %271 = vmatpush1.bf16.msra.mxu0 0
      %272 = vmatprep.subr.bf16.mxu0 0
      %273 = vmatpush1.bf16.msra.mxu0 0
      %274 = vmatprep.subr.bf16.mxu0 0
      %275 = vmatpush1.bf16.msra.mxu0 0
      %276 = vmatprep.subr.bf16.mxu0 0
      %277 = vmatpush1.bf16.msra.mxu0 0
      %278 = vmatprep.subr.bf16.mxu0 0
      %279 = vmatpush1.bf16.msra.mxu0 0
      %280 = vmatprep.subr.bf16.mxu0 0
      %281 = vmatpush1.bf16.msra.mxu0 0
      %282 = vmatprep.subr.bf16.mxu0 0
      %283 = vmatpush1.bf16.msra.mxu0 0
      %284 = vmatprep.subr.bf16.mxu0 0
      %285 = vmatpush1.bf16.msra.mxu0 0
      %286 = vmatprep.subr.bf16.mxu0 0
      %287 = vmatpush1.bf16.msra.mxu0 0
      %288 = vmatprep.subr.bf16.mxu0 0
      %289 = vmatpush1.bf16.msra.mxu0 0
      %290 = vmatprep.subr.bf16.mxu0 0
      %291 = vmatpush1.bf16.msra.mxu0 0
      %292 = vmatprep.mubr.bf16.mxu0 0
      %293 = vmatmul.mubr.bf16.gmra.mrb[0].mxu0 %v237
      %v294 = vpop.f32.mrb[0].mxu0
      %v295 = vadd.f32 0.0, %v294
      %v296 = vpop.f32.mrb[0].mxu0
      %v297 = vpop.f32.mrb[0].mxu0
      %v298 = vadd.f32 0.0, %v297
      %v299 = vpop.f32.mrb[0].mxu0
      %300 = vmatprep.mubr.bf16.mxu0 0
      %301 = vmatmul.mubr.bf16.gmra.mrb[0].mxu0 %v240
      %v302 = vpop.f32.mrb[0].mxu0
      %v303 = vadd.f32 0.0, %v302
      %v304 = vpop.f32.mrb[0].mxu0
      %v305 = vpop.f32.mrb[0].mxu0
      %v306 = vadd.f32 0.0, %v305
      %v307 = vpop.f32.mrb[0].mxu0
      %308 = vmatprep.mubr.bf16.mxu0 0
      %309 = vmatmul.mubr.bf16.gmra.mrb[0].mxu0 %v243
      %v310 = vpop.f32.mrb[0].mxu0
      %v311 = vadd.f32 0.0, %v310
      %v312 = vpop.f32.mrb[0].mxu0
      %v313 = vpop.f32.mrb[0].mxu0
      %v314 = vadd.f32 0.0, %v313
      %v315 = vpop.f32.mrb[0].mxu0
      %316 = vmatprep.mubr.bf16.mxu0 0
      %317 = vmatmul.mubr.bf16.gmra.mrb[0].mxu0 %v246
      %v318 = vpop.f32.mrb[0].mxu0
      %v319 = vadd.f32 0.0, %v318
      %v320 = vpop.f32.mrb[0].mxu0
      %v321 = vpop.f32.mrb[0].mxu0
      %v322 = vadd.f32 0.0, %v321
      %v323 = vpop.f32.mrb[0].mxu0
      %324 = vmatprep.mubr.bf16.mxu0 0
      %325 = vmatmul.mubr.bf16.gmra.mrb[0].mxu0 %v249
      %v326 = vpop.f32.mrb[0].mxu0
      %v327 = vadd.f32 0.0, %v326
      %v328 = vpop.f32.mrb[0].mxu0
      %v329 = vpop.f32.mrb[0].mxu0
      %v330 = vadd.f32 0.0, %v329
      %v331 = vpop.f32.mrb[0].mxu0
      %332 = vmatprep.mubr.bf16.mxu0 0
      %333 = vmatmul.mubr.bf16.gmra.mrb[0].mxu0 %v252
      %v334 = vpop.f32.mrb[0].mxu0
      %v335 = vadd.f32 0.0, %v334
      %v336 = vpop.f32.mrb[0].mxu0
      %v337 = vpop.f32.mrb[0].mxu0
      %v338 = vadd.f32 0.0, %v337
      %v339 = vpop.f32.mrb[0].mxu0
      %340 = vmatprep.mubr.bf16.mxu0 0
      %341 = vmatmul.mubr.bf16.gmra.mrb[0].mxu0 %v255
      %v342 = vpop.f32.mrb[0].mxu0
      %v343 = vadd.f32 0.0, %v342
      %v344 = vpop.f32.mrb[0].mxu0
      %v345 = vpop.f32.mrb[0].mxu0
      %v346 = vadd.f32 0.0, %v345
      %v347 = vpop.f32.mrb[0].mxu0
      %348 = vmatprep.mubr.bf16.mxu0 0
      %349 = vmatmul.mubr.bf16.gmra.mrb[0].mxu0 %v258
      %v350 = vpop.f32.mrb[0].mxu0
      %v351 = vadd.f32 0.0, %v350
      %v352 = vpop.f32.mrb[0].mxu0
      %v353 = vpop.f32.mrb[0].mxu0
      %v354 = vadd.f32 0.0, %v353
      %v355 = vpop.f32.mrb[0].mxu0
      %356 = vdwg.mxu0
      %v357 = vld [vmem:[%s2] sm:$0xff]
      %v358 = vadd.f32 %v295, %v298
      %v359 = vadd.f32 %v358, %v303
      %v360 = vadd.f32 %v359, %v306
      %v361 = vadd.f32 %v360, %v311
      %v362 = vadd.f32 %v361, %v314
      %v363 = vadd.f32 %v362, %v319
      %v364 = vadd.f32 %v363, %v322
      %v365 = vadd.f32 %v364, %v327
      %v366 = vadd.f32 %v365, %v330
      %v367 = vadd.f32 %v366, %v335
      %v368 = vadd.f32 %v367, %v338
      %v369 = vadd.f32 %v368, %v343
      %v370 = vadd.f32 %v369, %v346
      %v371 = vadd.f32 %v370, %v351
      %v372 = vadd.f32 %v371, %v354
      %v373 = vadd.f32 %v357, %v372
      %374 = vst [vmem:[%s2] sm:$0xff] %v373
      %v375 = vld [vmem:[%s3] sm:$0xff]
      %v376 = vmul.f32 %v295, %v295
      %v377 = vmul.f32 %v298, %v298
      %v378 = vmul.f32 %v303, %v303
      %v379 = vmul.f32 %v306, %v306
      %v380 = vmul.f32 %v311, %v311
      %v381 = vmul.f32 %v314, %v314
      %v382 = vmul.f32 %v319, %v319
      %v383 = vmul.f32 %v322, %v322
      %v384 = vmul.f32 %v327, %v327
      %v385 = vmul.f32 %v330, %v330
      %v386 = vmul.f32 %v335, %v335
      %v387 = vmul.f32 %v338, %v338
      %v388 = vmul.f32 %v343, %v343
      %v389 = vmul.f32 %v346, %v346
      %v390 = vmul.f32 %v351, %v351
      %v391 = vmul.f32 %v354, %v354
      %v392 = vadd.f32 %v376, %v377
      %v393 = vadd.f32 %v392, %v378
      %v394 = vadd.f32 %v393, %v379
      %v395 = vadd.f32 %v394, %v380
      %v396 = vadd.f32 %v395, %v381
      %v397 = vadd.f32 %v396, %v382
      %v398 = vadd.f32 %v397, %v383
      %v399 = vadd.f32 %v398, %v384
      %v400 = vadd.f32 %v399, %v385
      %v401 = vadd.f32 %v400, %v386
      %v402 = vadd.f32 %v401, %v387
      %v403 = vadd.f32 %v402, %v388
      %v404 = vadd.f32 %v403, %v389
      %v405 = vadd.f32 %v404, %v390
      %v406 = vadd.f32 %v405, %v391
      %v407 = vadd.f32 %v375, %v406
      %408 = vst [vmem:[%s3] sm:$0xff] %v407
      // Predicated region
      $region33: #{shortcut_projection.2} parent=27 // pred_check
        %p409 = pneg %p75
      $region34: #{shortcut_projection.2} parent=27 // pred_check_branch
        %411 = sbr.rel (%p409) target = $region36
      $region35: #{shortcut_projection.2} parent=27 // pred_region
        _
      $region36: #{shortcut_projection.2} parent=27 // pred_fallthru
        _
      // Predicated region
      $region37: #{shortcut_projection.2} parent=27 // pred_check
        %p412 = pneg %p96
      $region38: #{shortcut_projection.2} parent=27 // pred_check_branch
        %414 = sbr.rel (%p412) target = $region40
      $region39: #{shortcut_projection.2} parent=27 // pred_region
        _
      $region40: #{shortcut_projection.2} parent=27 // pred_fallthru
        _
      // Predicated region
      $region41: #{shortcut_projection.2} parent=27 // pred_check
        %p415 = pneg %p75
      $region42: #{shortcut_projection.2} parent=27 // pred_check_branch
        %417 = sbr.rel (%p415) target = $region44
      $region43: #{shortcut_projection.2} parent=27 // pred_region
        _
      $region44: #{shortcut_projection.2} parent=27 // pred_fallthru
        _
      // Predicated region
      $region45: #{shortcut_projection.2} parent=27 // pred_check
        %p418 = pneg %p96
      $region46: #{shortcut_projection.2} parent=27 // pred_check_branch
        %420 = sbr.rel (%p418) target = $region48
      $region47: #{shortcut_projection.2} parent=27 // pred_region
        _
      $region48: #{shortcut_projection.2} parent=27 // pred_fallthru
        _
    $region28: #{shortcut_projection.2} parent=5 // pred_fallthru
      _
    %p421 = scmp.le.s32.totalorder 2, %s10
    // Predicated region
    $region49: #{shortcut_projection.2} parent=5 // pred_check
      %p422 = pneg %p421
    $region50: #{shortcut_projection.2} parent=5 // pred_check_branch
      %424 = sbr.rel (%p422) target = $region52
    $region51: #{shortcut_projection.2} parent=5 // pred_region
      %s425 = ssub.s32 %s10, 2
    $region52: #{shortcut_projection.2} parent=5 // pred_fallthru
      _
  $region6: #{shortcut_projection.2} parent=0 // loop_footer
    %s14 = sadd.s32 1, %s10
  $region7: #{shortcut_projection.2} parent=0 // loop_footer_branch
    %9 = sbr.rel target = $region3
  $region8: #{shortcut_projection.2} parent=0 // loop_exit
    _

// kernel: shortcut_projection.3
$region0: #{shortcut_projection.3}
  #allocation0 [shape = 'u32[]', space=smem, size = 0x4, offset = 0x4, fixed_abs, tag = 'smem constant byte address 0x4 - core index']
  #allocation1 [shape = 'u32[144,128]{1,0:T(1,128)}', space=vmem, size = 0x12000, scoped, tag = 'internal scratch']
  %s0 = inlined_call_operand.vmem [shape: bf16[512,32], index: 0, kind: input, shape index: {}]
  %s1 = inlined_call_operand.vmem [shape: bf16[32,128], index: 1, kind: input, shape index: {}]
  %s2 = inlined_call_operand.vmem [shape: f32[8,128], index: 2, kind: input, shape index: {}]
  %s3 = inlined_call_operand.vmem [shape: f32[8,128], index: 3, kind: input, shape index: {}]
  %s4 = inlined_call_operand.vmem [shape: f32[1,128], index: 4, kind: input, shape index: {}]
  %s5 = inlined_call_operand.vmem [shape: f32[1,128], index: 5, kind: input, shape index: {}]
  %s6 = inlined_call_operand.hbm [shape: f32[512,128], index: 6, kind: output, shape index: {}]
  %s7 = sld [smem:[#allocation0]]
  $region57: #{shortcut_projection.3} parent=0
    _
  %s9 = ssub.s32 1, %s7
  %s10 = scalar_select 0, %s9, %s7
  $region1: #{shortcut_projection.3} parent=0
    #allocation2 [shape = 'u8[131072]{0}', space=vmem, size = 0x20000, scoped, tag = 'output window, operand 0']
    #allocation3 [shape = 's32[2]{0}', space=sflag, size = 0x8, scoped, tag = 'scoped memory for shortcut_projection.3']
    %11 = vsyncpa [#allocation3], 0
    %s12 = scalar_lea.sflag [#allocation3], 1
    %13 = vsyncpa %s12, 0
    loop: start=0, step=1, limit=6
    $region2: #{shortcut_projection.3} parent=1 // loop_pre_header
      _
    $region3: #{shortcut_projection.3} parent=1 // loop_header
      %s15 = sphi 0, %s19
      %p16 = scmp.ge.s32.totalorder %s15, 6
      %s25 = sphi 0, %s27
      %s28 = sphi 0, %s25
      %s29 = sphi 0, %s28
      %s45 = sphi 0, %s29
      %s49 = sphi 0, %s49
      %s51 = sphi 0, %s49
      %s52 = sphi 0, %s51
      %s66 = sphi 0, %s52
      %s70 = sphi 0, %s70
      %s72 = sphi 0, %s70
      %s73 = sphi 0, %s72
      %s87 = sphi 0, %s73
      %s91 = sphi 0, %s91
      %s93 = sphi 0, %s91
      %s94 = sphi 0, %s93
      %s108 = sphi 0, %s94
      %s112 = sphi 0, %s112
      %s114 = sphi 0, %s112
      %s115 = sphi 0, %s114
      %s129 = sphi 0, %s115
      %s133 = sphi 0, %s133
      %s135 = sphi 0, %s133
      %s136 = sphi 0, %s135
      %s150 = sphi 0, %s136
      %s156 = sphi 0, %s158
      %s159 = sphi 0, %s156
      %s160 = sphi 0, %s159
      %s176 = sphi 0, %s160
    $region4: #{shortcut_projection.3} parent=1 // loop_header_branch
      %18 = sbr.rel (%p16) target = $region8
    $region5: #{shortcut_projection.3} parent=1 // loop_body
      %s20 = ssub.s32 %s15, 1
      %s21 = ssub.s32 %s15, 2
      %s22 = sadd.s32 %s15, 1
      %s23 = ssub.s32 %s15, %s22
      %p24 = scmp.eq.s32.totalorder %s23, 0
      %s26 = sadd.s32 %s25, 1
      %s27 = scalar_select %p24, %s25, %s26
      %p30 = pneg %p24
      %p31 = scmp.eq.s32.totalorder %s15, 3
      %p32 = por %p30, %p31
      %p33 = scmp.ne.s32.totalorder %s25, %s28
      %p34 = scmp.eq.s32.totalorder %s15, 0
      %p35 = por %p33, %p34
      %p36 = scmp.ne.s32.totalorder %s25, %s28
      %p37 = scmp.eq.s32.totalorder %s20, 3
      %p38 = por %p36, %p37
      %p39 = scmp.ne.s32.totalorder %s28, %s29
      %p40 = scmp.eq.s32.totalorder %s20, 0
      %p41 = por %p39, %p40
      %p42 = scmp.ne.s32.totalorder %s28, %s29
      %p43 = scmp.eq.s32.totalorder %s21, 3
      %p44 = por %p42, %p43
      %p46 = scmp.ne.s32.totalorder %s29, %s45
      %p47 = scmp.eq.s32.totalorder %s21, 0
      %p48 = por %p46, %p47
      %s50 = sadd.s32 %s49, 1
      %p53 = scmp.eq.s32.totalorder %s15, 3
      %p54 = scmp.ne.s32.totalorder %s49, %s51
      %p55 = scmp.eq.s32.totalorder %s15, 0
      %p56 = por %p54, %p55
      %p57 = scmp.ne.s32.totalorder %s49, %s51
      %p58 = scmp.eq.s32.totalorder %s20, 3
      %p59 = por %p57, %p58
      %p60 = scmp.ne.s32.totalorder %s51, %s52
      %p61 = scmp.eq.s32.totalorder %s20, 0
      %p62 = por %p60, %p61
      %p63 = scmp.ne.s32.totalorder %s51, %s52
      %p64 = scmp.eq.s32.totalorder %s21, 3
      %p65 = por %p63, %p64
      %p67 = scmp.ne.s32.totalorder %s52, %s66
      %p68 = scmp.eq.s32.totalorder %s21, 0
      %p69 = por %p67, %p68
      %s71 = sadd.s32 %s70, 1
      %p74 = scmp.eq.s32.totalorder %s15, 3
      %p75 = scmp.ne.s32.totalorder %s70, %s72
      %p76 = scmp.eq.s32.totalorder %s15, 0
      %p77 = por %p75, %p76
      %p78 = scmp.ne.s32.totalorder %s70, %s72
      %p79 = scmp.eq.s32.totalorder %s20, 3
      %p80 = por %p78, %p79
      %p81 = scmp.ne.s32.totalorder %s72, %s73
      %p82 = scmp.eq.s32.totalorder %s20, 0
      %p83 = por %p81, %p82
      %p84 = scmp.ne.s32.totalorder %s72, %s73
      %p85 = scmp.eq.s32.totalorder %s21, 3
      %p86 = por %p84, %p85
      %p88 = scmp.ne.s32.totalorder %s73, %s87
      %p89 = scmp.eq.s32.totalorder %s21, 0
      %p90 = por %p88, %p89
      %s92 = sadd.s32 %s91, 1
      %p95 = scmp.eq.s32.totalorder %s15, 3
      %p96 = scmp.ne.s32.totalorder %s91, %s93
      %p97 = scmp.eq.s32.totalorder %s15, 0
      %p98 = por %p96, %p97
      %p99 = scmp.ne.s32.totalorder %s91, %s93
      %p100 = scmp.eq.s32.totalorder %s20, 3
      %p101 = por %p99, %p100
      %p102 = scmp.ne.s32.totalorder %s93, %s94
      %p103 = scmp.eq.s32.totalorder %s20, 0
      %p104 = por %p102, %p103
      %p105 = scmp.ne.s32.totalorder %s93, %s94
      %p106 = scmp.eq.s32.totalorder %s21, 3
      %p107 = por %p105, %p106
      %p109 = scmp.ne.s32.totalorder %s94, %s108
      %p110 = scmp.eq.s32.totalorder %s21, 0
      %p111 = por %p109, %p110
      %s113 = sadd.s32 %s112, 1
      %p116 = scmp.eq.s32.totalorder %s15, 3
      %p117 = scmp.ne.s32.totalorder %s112, %s114
      %p118 = scmp.eq.s32.totalorder %s15, 0
      %p119 = por %p117, %p118
      %p120 = scmp.ne.s32.totalorder %s112, %s114
      %p121 = scmp.eq.s32.totalorder %s20, 3
      %p122 = por %p120, %p121
      %p123 = scmp.ne.s32.totalorder %s114, %s115
      %p124 = scmp.eq.s32.totalorder %s20, 0
      %p125 = por %p123, %p124
      %p126 = scmp.ne.s32.totalorder %s114, %s115
      %p127 = scmp.eq.s32.totalorder %s21, 3
      %p128 = por %p126, %p127
      %p130 = scmp.ne.s32.totalorder %s115, %s129
      %p131 = scmp.eq.s32.totalorder %s21, 0
      %p132 = por %p130, %p131
      %s134 = sadd.s32 %s133, 1
      %p137 = scmp.eq.s32.totalorder %s15, 3
      %p138 = scmp.ne.s32.totalorder %s133, %s135
      %p139 = scmp.eq.s32.totalorder %s15, 0
      %p140 = por %p138, %p139
      %p141 = scmp.ne.s32.totalorder %s133, %s135
      %p142 = scmp.eq.s32.totalorder %s20, 3
      %p143 = por %p141, %p142
      %p144 = scmp.ne.s32.totalorder %s135, %s136
      %p145 = scmp.eq.s32.totalorder %s20, 0
      %p146 = por %p144, %p145
      %p147 = scmp.ne.s32.totalorder %s135, %s136
      %p148 = scmp.eq.s32.totalorder %s21, 3
      %p149 = por %p147, %p148
      %p151 = scmp.ne.s32.totalorder %s136, %s150
      %p152 = scmp.eq.s32.totalorder %s21, 0
      %p153 = por %p151, %p152
      %s154 = ssub.s32 %s15, %s22
      %p155 = scmp.eq.s32.totalorder %s154, 0
      %s157 = sadd.s32 %s156, 1
      %s158 = scalar_select %p155, %s156, %s157
      %p161 = pneg %p155
      %p162 = scmp.eq.s32.totalorder %s15, 3
      %p163 = por %p161, %p162
      %p164 = scmp.ne.s32.totalorder %s156, %s159
      %p165 = scmp.eq.s32.totalorder %s15, 0
      %p166 = por %p164, %p165
      %p167 = scmp.ne.s32.totalorder %s156, %s159
      %p168 = scmp.eq.s32.totalorder %s20, 3
      %p169 = por %p167, %p168
      %p170 = scmp.ne.s32.totalorder %s159, %s160
      %p171 = scmp.eq.s32.totalorder %s20, 0
      %p172 = por %p170, %p171
      %p173 = scmp.ne.s32.totalorder %s159, %s160
      %p174 = scmp.eq.s32.totalorder %s21, 3
      %p175 = por %p173, %p174
      %p177 = scmp.ne.s32.totalorder %s160, %s176
      %p178 = scmp.eq.s32.totalorder %s21, 0
      %p179 = por %p177, %p178
      %p180 = scmp.le.s32.totalorder 1, %s15
      %p181 = scmp.lt.s32.totalorder %s15, 5
      %p182 = pnand %p180, %p181
      %p183 = pneg %p182
      // Predicated region
      $region9: #{shortcut_projection.3} parent=5 // pred_check
        _
      $region10: #{shortcut_projection.3} parent=5 // pred_check_branch
        %185 = sbr.rel (%p182) target = $region12
      $region11: #{shortcut_projection.3} parent=5 // pred_region
        %s186 = ssub.s32 %s15, 1
        // Predicated region
        $region13: #{shortcut_projection.3} parent=11 // pred_check
          %p187 = pneg %p62
        $region14: #{shortcut_projection.3} parent=11 // pred_check_branch
          %189 = sbr.rel (%p187) target = $region16
        $region15: #{shortcut_projection.3} parent=11 // pred_region
          _
        $region16: #{shortcut_projection.3} parent=11 // pred_fallthru
          _
        // Predicated region
        $region17: #{shortcut_projection.3} parent=11 // pred_check
          %p190 = pneg %p83
        $region18: #{shortcut_projection.3} parent=11 // pred_check_branch
          %192 = sbr.rel (%p190) target = $region20
        $region19: #{shortcut_projection.3} parent=11 // pred_region
          _
        $region20: #{shortcut_projection.3} parent=11 // pred_fallthru
          _
        // Predicated region
        $region21: #{shortcut_projection.3} parent=11 // pred_check
          %p193 = pneg %p104
        $region22: #{shortcut_projection.3} parent=11 // pred_check_branch
          %195 = sbr.rel (%p193) target = $region24
        $region23: #{shortcut_projection.3} parent=11 // pred_region
          _
        $region24: #{shortcut_projection.3} parent=11 // pred_fallthru
          _
        // Predicated region
        $region25: #{shortcut_projection.3} parent=11 // pred_check
          %p196 = pneg %p125
        $region26: #{shortcut_projection.3} parent=11 // pred_check_branch
          %198 = sbr.rel (%p196) target = $region28
        $region27: #{shortcut_projection.3} parent=11 // pred_region
          _
        $region28: #{shortcut_projection.3} parent=11 // pred_fallthru
          _
        // Predicated region
        $region29: #{shortcut_projection.3} parent=11 // pred_check
          %p199 = pneg %p146
        $region30: #{shortcut_projection.3} parent=11 // pred_check_branch
          %201 = sbr.rel (%p199) target = $region32
        $region31: #{shortcut_projection.3} parent=11 // pred_region
          _
        $region32: #{shortcut_projection.3} parent=11 // pred_fallthru
          _
      $region12: #{shortcut_projection.3} parent=5 // pred_fallthru
        _
      %p202 = scmp.lt.s32.totalorder %s15, 4
      // Predicated region
      $region33: #{shortcut_projection.3} parent=5 // pred_check
        %p203 = pneg %p202
      $region34: #{shortcut_projection.3} parent=5 // pred_check_branch
        %205 = sbr.rel (%p203) target = $region36
      $region35: #{shortcut_projection.3} parent=5 // pred_region
        // Predicated region
        $region37: #{shortcut_projection.3} parent=35 // pred_check
          %p206 = pneg %p35
        $region38: #{shortcut_projection.3} parent=35 // pred_check_branch
          %208 = sbr.rel (%p206) target = $region40
        $region39: #{shortcut_projection.3} parent=35 // pred_region
          %s209 = smul.u32 16, %s15
          %p210 = scmp.lt.s32.totalorder %s209, 63
          %s211 = scalar_select %p210, %s209, 63
          %s212 = smul.addr %s211, 4
          %s213 = scalar_lea.vmem %s0, %s212
          %s214 = smul.u32 16, %s15
        $region40: #{shortcut_projection.3} parent=35 // pred_fallthru
          _
      $region36: #{shortcut_projection.3} parent=5 // pred_fallthru
        _
      %p215 = scmp.le.s32.totalorder 1, %s15
      %p216 = scmp.lt.s32.totalorder %s15, 5
      %p217 = pnand %p215, %p216
      %p218 = pneg %p217
      // Predicated region
      $region41: #{shortcut_projection.3} parent=5 // pred_check
        _
      $region42: #{shortcut_projection.3} parent=5 // pred_check_branch
        %220 = sbr.rel (%p217) target = $region44
      $region43: #{shortcut_projection.3} parent=5 // pred_region
        %s221 = ssub.s32 %s15, 1
        %s222 = smul.u32 16, %s20
        %p223 = scmp.lt.s32.totalorder %s222, 63
        %s224 = scalar_select %p223, %s222, 63
        %s225 = smul.addr %s224, 4
        %s226 = scalar_lea.vmem %s0, %s225
        %p227 = pneg %p41
        %p228 = pneg %p38
        %p229 = pneg %p62
        %p230 = pneg %p59
        %p231 = pneg %p83
        %p232 = pneg %p80
        %p233 = pneg %p104
        %p234 = pneg %p101
        %p235 = pneg %p125
        %p236 = pneg %p122
        %p237 = pneg %p146
        %p238 = pneg %p143
        %p239 = pneg %p172
        %p240 = pneg %p169
        %s241 = sand.u32 %s159, 1
        %s242 = scalar_lea.sflag [#allocation3], %s241
        %s243 = sand.u32 %s159, 1
        %s244 = smul.addr %s243, 128
        %s245 = scalar_lea.vmem [#allocation2], %s244
        %s246 = smul.u32 16, %s20
        %p247 = scmp.lt.s32.totalorder %s246, 63
        %s248 = scalar_select %p247, %s246, 63
        %s249 = smul.addr %s248, 4
        %s250 = scalar_lea.vmem %s0, %s249
        %s251 = smul.u32 16, %s20
        %s252 = smul.u32 16, %s20
        %v254 = vld [vmem:[%s250] sm:$0xf]
        %v255 = vld [vmem:[%s250 + $0x4] sm:$0xf]
        %v256 = vld [vmem:[%s250 + $0x8] sm:$0xf]
        %v257 = vld [vmem:[%s250 + $0xc] sm:$0xf]
        %v258 = vld [vmem:[%s250 + $0x10] sm:$0xf]
        %v259 = vld [vmem:[%s250 + $0x14] sm:$0xf]
        %v260 = vld [vmem:[%s250 + $0x18] sm:$0xf]
        %v261 = vld [vmem:[%s250 + $0x1c] sm:$0xf]
        %v262 = vld [vmem:[%s250 + $0x20] sm:$0xf]
        %v263 = vld [vmem:[%s250 + $0x24] sm:$0xf]
        %v264 = vld [vmem:[%s250 + $0x28] sm:$0xf]
        %v265 = vld [vmem:[%s250 + $0x2c] sm:$0xf]
        %v266 = vld [vmem:[%s250 + $0x30] sm:$0xf]
        %v267 = vld [vmem:[%s250 + $0x34] sm:$0xf]
        %v268 = vld [vmem:[%s250 + $0x38] sm:$0xf]
        %v269 = vld [vmem:[%s250 + $0x3c] sm:$0xf]
        %v270 = vld [vmem:[%s1] sm:$0xf]
        %v271 = vld [vmem:[%s1 + $0x4] sm:$0xf]
        %v272 = vld [vmem:[%s1 + $0x8] sm:$0xf]
        %v273 = vld [vmem:[%s1 + $0xc] sm:$0xf]
        %v290 = vunpack.c.l.b16 %v254
        %v291 = vunpack.c.l.b16 %v255
        %v292 = vunpack.c.l.b16 %v256
        %v293 = vunpack.c.l.b16 %v257
        %v294 = vunpack.c.l.b16 %v258
        %v295 = vunpack.c.l.b16 %v259
        %v296 = vunpack.c.l.b16 %v260
        %v297 = vunpack.c.l.b16 %v261
        %v298 = vunpack.c.l.b16 %v262
        %v299 = vunpack.c.l.b16 %v263
        %v300 = vunpack.c.l.b16 %v264
        %v301 = vunpack.c.l.b16 %v265
        %v302 = vunpack.c.l.b16 %v266
        %v303 = vunpack.c.l.b16 %v267
        %v304 = vunpack.c.l.b16 %v268
        %v305 = vunpack.c.l.b16 %v269
        %v306 = vpack.c.b16 %v291, %v290
        %v307 = vpack.c.b16 %v293, %v292
        %v308 = vpack.c.b16 %v295, %v294
        %v309 = vpack.c.b16 %v297, %v296
        %v310 = vpack.c.b16 %v299, %v298
        %v311 = vpack.c.b16 %v301, %v300
        %v312 = vpack.c.b16 %v303, %v302
        %v313 = vpack.c.b16 %v305, %v304
        %v318 = vunpack.c.l.b16 %v270
        %v319 = vunpack.c.l.b16 %v271
        %v320 = vunpack.c.l.b16 %v272
        %v321 = vunpack.c.l.b16 %v273
        %v322 = vpack.c.b16 %v319, %v318
        %v323 = vpack.c.b16 %v321, %v320
        %vm326 = vcmask 261120
        %v328 = vsel %vm326, %v306, 0
        %v331 = vsel %vm326, %v307, 0
        %v334 = vsel %vm326, %v308, 0
        %v337 = vsel %vm326, %v309, 0
        %v340 = vsel %vm326, %v310, 0
        %v343 = vsel %vm326, %v311, 0
        %v346 = vsel %vm326, %v312, 0
        %v349 = vsel %vm326, %v313, 0
        %351 = vmatprep.subr.bf16.mxu0 0
        %352 = vmatpush1.bf16.msra.mxu0 %v322
        %353 = vmatprep.subr.bf16.mxu0 0
        %354 = vmatpush1.bf16.msra.mxu0 %v323
        %355 = vmatprep.subr.bf16.mxu0 0
        %356 = vmatpush1.bf16.msra.mxu0 0
        %357 = vmatprep.subr.bf16.mxu0 0
        %358 = vmatpush1.bf16.msra.mxu0 0
        %359 = vmatprep.subr.bf16.mxu0 0
        %360 = vmatpush1.bf16.msra.mxu0 0
        %361 = vmatprep.subr.bf16.mxu0 0
        %362 = vmatpush1.bf16.msra.mxu0 0
        %363 = vmatprep.subr.bf16.mxu0 0
        %364 = vmatpush1.bf16.msra.mxu0 0
        %365 = vmatprep.subr.bf16.mxu0 0
        %366 = vmatpush1.bf16.msra.mxu0 0
        %367 = vmatprep.subr.bf16.mxu0 0
        %368 = vmatpush1.bf16.msra.mxu0 0
        %369 = vmatprep.subr.bf16.mxu0 0
        %370 = vmatpush1.bf16.msra.mxu0 0
        %371 = vmatprep.subr.bf16.mxu0 0
        %372 = vmatpush1.bf16.msra.mxu0 0
        %373 = vmatprep.subr.bf16.mxu0 0
        %374 = vmatpush1.bf16.msra.mxu0 0
        %375 = vmatprep.subr.bf16.mxu0 0
        %376 = vmatpush1.bf16.msra.mxu0 0
        %377 = vmatprep.subr.bf16.mxu0 0
        %378 = vmatpush1.bf16.msra.mxu0 0
        %379 = vmatprep.subr.bf16.mxu0 0
        %380 = vmatpush1.bf16.msra.mxu0 0
        %381 = vmatprep.subr.bf16.mxu0 0
        %382 = vmatpush1.bf16.msra.mxu0 0
        %383 = vmatprep.mubr.bf16.mxu0 0
        %384 = vmatmul.mubr.bf16.gmra.mrb[0].mxu0 %v328
        %v385 = vpop.f32.mrb[0].mxu0
        %v386 = vadd.f32 0.0, %v385
        %v387 = vpop.f32.mrb[0].mxu0
        %v388 = vpop.f32.mrb[0].mxu0
        %v389 = vadd.f32 0.0, %v388
        %v390 = vpop.f32.mrb[0].mxu0
        %391 = vmatprep.mubr.bf16.mxu0 0
        %392 = vmatmul.mubr.bf16.gmra.mrb[0].mxu0 %v331
        %v393 = vpop.f32.mrb[0].mxu0
        %v394 = vadd.f32 0.0, %v393
        %v395 = vpop.f32.mrb[0].mxu0
        %v396 = vpop.f32.mrb[0].mxu0
        %v397 = vadd.f32 0.0, %v396
        %v398 = vpop.f32.mrb[0].mxu0
        %399 = vmatprep.mubr.bf16.mxu0 0
        %400 = vmatmul.mubr.bf16.gmra.mrb[0].mxu0 %v334
        %v401 = vpop.f32.mrb[0].mxu0
        %v402 = vadd.f32 0.0, %v401
        %v403 = vpop.f32.mrb[0].mxu0
        %v404 = vpop.f32.mrb[0].mxu0
        %v405 = vadd.f32 0.0, %v404
        %v406 = vpop.f32.mrb[0].mxu0
        %407 = vmatprep.mubr.bf16.mxu0 0
        %408 = vmatmul.mubr.bf16.gmra.mrb[0].mxu0 %v337
        %v409 = vpop.f32.mrb[0].mxu0
        %v410 = vadd.f32 0.0, %v409
        %v411 = vpop.f32.mrb[0].mxu0
        %v412 = vpop.f32.mrb[0].mxu0
        %v413 = vadd.f32 0.0, %v412
        %v414 = vpop.f32.mrb[0].mxu0
        %415 = vmatprep.mubr.bf16.mxu0 0
        %416 = vmatmul.mubr.bf16.gmra.mrb[0].mxu0 %v340
        %v417 = vpop.f32.mrb[0].mxu0
        %v418 = vadd.f32 0.0, %v417
        %v419 = vpop.f32.mrb[0].mxu0
        %v420 = vpop.f32.mrb[0].mxu0
        %v421 = vadd.f32 0.0, %v420
        %v422 = vpop.f32.mrb[0].mxu0
        %423 = vmatprep.mubr.bf16.mxu0 0
        %424 = vmatmul.mubr.bf16.gmra.mrb[0].mxu0 %v343
        %v425 = vpop.f32.mrb[0].mxu0
        %v426 = vadd.f32 0.0, %v425
        %v427 = vpop.f32.mrb[0].mxu0
        %v428 = vpop.f32.mrb[0].mxu0
        %v429 = vadd.f32 0.0, %v428
        %v430 = vpop.f32.mrb[0].mxu0
        %431 = vmatprep.mubr.bf16.mxu0 0
        %432 = vmatmul.mubr.bf16.gmra.mrb[0].mxu0 %v346
        %v433 = vpop.f32.mrb[0].mxu0
        %v434 = vadd.f32 0.0, %v433
        %v435 = vpop.f32.mrb[0].mxu0
        %v436 = vpop.f32.mrb[0].mxu0
        %v437 = vadd.f32 0.0, %v436
        %v438 = vpop.f32.mrb[0].mxu0
        %439 = vmatprep.mubr.bf16.mxu0 0
        %440 = vmatmul.mubr.bf16.gmra.mrb[0].mxu0 %v349
        %v441 = vpop.f32.mrb[0].mxu0
        %v442 = vadd.f32 0.0, %v441
        %v443 = vpop.f32.mrb[0].mxu0
        %v444 = vpop.f32.mrb[0].mxu0
        %v445 = vadd.f32 0.0, %v444
        %v446 = vpop.f32.mrb[0].mxu0
        %447 = vdwg.mxu0
        %v448 = vld [vmem:[%s2] sm:$0xff]
        %v449 = vrot.slane %v448, 4
        %v450 = vadd.f32 %v448, %v449
        %v451 = vrot.slane %v450, 2
        %v452 = vadd.f32 %v450, %v451
        %v453 = vrot.slane %v452, 1
        %v454 = vadd.f32 %v452, %v453
        %v455 = vld [vmem:[%s3] sm:$0xff]
        %v456 = vrot.slane %v455, 4
        %v457 = vadd.f32 %v455, %v456
        %v458 = vrot.slane %v457, 2
        %v459 = vadd.f32 %v457, %v458
        %v460 = vrot.slane %v459, 1
        %v461 = vadd.f32 %v459, %v460
        %v462 = vmul.f32 %v454, 0.001953125
        %v463 = vmul.f32 %v461, 0.001953125
        %v464 = vmul.f32 %v462, %v462
        %v465 = vsub.f32 %v463, %v464
        %v466 = vld [vmem:[%s4] sm:$0x1]
        %v467 = vadd.f32 %v465, 1e-05
        %v468 = vrsqrt.pop %v467
        %v469 = vmul.f32 %v466, %v468
        %v470 = vld [vmem:[%s5] sm:$0x1]
        %v471 = vmul.f32 %v462, %v469
        %v472 = vsub.f32 %v470, %v471
        %v474 = vlaneseq
        %v475 = vshrl.u32 %v474, 7
        %v476 = vsub.s32 0, %v475
        %v477 = vrot.slane %v469, %v476
        %v479 = vmul.f32 %v386, %v477
        %v480 = vmul.f32 %v389, %v477
        %v481 = vmul.f32 %v394, %v477
        %v482 = vmul.f32 %v397, %v477
        %v483 = vmul.f32 %v402, %v477
        %v484 = vmul.f32 %v405, %v477
        %v485 = vmul.f32 %v410, %v477
        %v486 = vmul.f32 %v413, %v477
        %v487 = vmul.f32 %v418, %v477
        %v488 = vmul.f32 %v421, %v477
        %v489 = vmul.f32 %v426, %v477
        %v490 = vmul.f32 %v429, %v477
        %v491 = vmul.f32 %v434, %v477
        %v492 = vmul.f32 %v437, %v477
        %v493 = vmul.f32 %v442, %v477
        %v494 = vmul.f32 %v445, %v477
        %v496 = vlaneseq
        %v497 = vshrl.u32 %v496, 7
        %v498 = vsub.s32 0, %v497
        %v499 = vrot.slane %v472, %v498
        %v501 = vadd.f32 %v479, %v499
        %v502 = vadd.f32 %v480, %v499
        %v503 = vadd.f32 %v481, %v499
        %v504 = vadd.f32 %v482, %v499
        %v505 = vadd.f32 %v483, %v499
        %v506 = vadd.f32 %v484, %v499
        %v507 = vadd.f32 %v485, %v499
        %v508 = vadd.f32 %v486, %v499
        %v509 = vadd.f32 %v487, %v499
        %v510 = vadd.f32 %v488, %v499
        %v511 = vadd.f32 %v489, %v499
        %v512 = vadd.f32 %v490, %v499
        %v513 = vadd.f32 %v491, %v499
        %v514 = vadd.f32 %v492, %v499
        %v515 = vadd.f32 %v493, %v499
        %v516 = vadd.f32 %v494, %v499
        %517 = vst [vmem:[%s245] sm:$0xff] %v501
        %518 = vst [vmem:[%s245 + $0x8] sm:$0xff] %v502
        %519 = vst [vmem:[%s245 + $0x10] sm:$0xff] %v503
        %520 = vst [vmem:[%s245 + $0x18] sm:$0xff] %v504
        %521 = vst [vmem:[%s245 + $0x20] sm:$0xff] %v505
        %522 = vst [vmem:[%s245 + $0x28] sm:$0xff] %v506
        %523 = vst [vmem:[%s245 + $0x30] sm:$0xff] %v507
        %524 = vst [vmem:[%s245 + $0x38] sm:$0xff] %v508
        %525 = vst [vmem:[%s245 + $0x40] sm:$0xff] %v509
        %526 = vst [vmem:[%s245 + $0x48] sm:$0xff] %v510
        %527 = vst [vmem:[%s245 + $0x50] sm:$0xff] %v511
        %528 = vst [vmem:[%s245 + $0x58] sm:$0xff] %v512
        %529 = vst [vmem:[%s245 + $0x60] sm:$0xff] %v513
        %530 = vst [vmem:[%s245 + $0x68] sm:$0xff] %v514
        %531 = vst [vmem:[%s245 + $0x70] sm:$0xff] %v515
        %532 = vst [vmem:[%s245 + $0x78] sm:$0xff] %v516
        %s533 = sand.u32 %s159, 1
        %s534 = scalar_lea.sflag [#allocation3], %s533
        %s535 = sand.u32 %s159, 1
        %s536 = smul.addr %s535, 128
        %s537 = scalar_lea.vmem [#allocation2], %s536
        // Predicated region
        $region45: #{shortcut_projection.3} parent=43 // pred_check
          %p538 = pneg %p169
        $region46: #{shortcut_projection.3} parent=43 // pred_check_branch
          %540 = sbr.rel (%p538) target = $region48
        $region47: #{shortcut_projection.3} parent=43 // pred_region
          %s541 = smul.u32 16, %s20
          %s543 = ssub.s32 2048, 2048
          %544 = vsyncadd %s534, %s543
          %s545 = smul.addr %s541, 128
          %s546 = scalar_lea.hbm %s6, %s545
          %s547 = sshll.u32 %s537, 4
          %s548 = int_to_ptr.vmem [resolvable:$true] %s547
          %553 = dma.vmem_to_hbm [thread:$0]  %s548, 2048, %s546, %s534, 128, 128, 8
        $region48: #{shortcut_projection.3} parent=43 // pred_fallthru
          _
      $region44: #{shortcut_projection.3} parent=5 // pred_fallthru
        _
      %p554 = scmp.le.s32.totalorder 2, %s15
      // Predicated region
      $region49: #{shortcut_projection.3} parent=5 // pred_check
        %p555 = pneg %p554
      $region50: #{shortcut_projection.3} parent=5 // pred_check_branch
        %557 = sbr.rel (%p555) target = $region52
      $region51: #{shortcut_projection.3} parent=5 // pred_region
        %s558 = ssub.s32 %s15, 2
        // Predicated region
        $region53: #{shortcut_projection.3} parent=51 // pred_check
          %p559 = pneg %p175
        $region54: #{shortcut_projection.3} parent=51 // pred_check_branch
          %561 = sbr.rel (%p559) target = $region56
        $region55: #{shortcut_projection.3} parent=51 // pred_region
          %s562 = sand.u32 %s160, 1
          %s563 = scalar_lea.sflag [#allocation3], %s562
          %s564 = sand.u32 %s160, 1
          %s565 = smul.addr %s564, 128
          %s566 = scalar_lea.vmem [#allocation2], %s565
          %567 = dma.done %s563, 2048
        $region56: #{shortcut_projection.3} parent=51 // pred_fallthru
          _
      $region52: #{shortcut_projection.3} parent=5 // pred_fallthru
        _
    $region6: #{shortcut_projection.3} parent=1 // loop_footer
      %s19 = sadd.s32 1, %s15
    $region7: #{shortcut_projection.3} parent=1 // loop_footer_branch
      %14 = sbr.rel target = $region3
    $region8: #{shortcut_projection.3} parent=1 // loop_exit
      _
    %568 = vsyncpa [#allocation3], 1
    %s569 = scalar_lea.sflag [#allocation3], 1
    %570 = vsyncpa %s569, 1

</llo_original>
